<compile_context>
chip_gen: v6e
topology: v6e:2x2x1
jax: 0.10.0
libtpu: 0.0.40
codegen_flags: <defaults>
</compile_context>

<pallas_src>
import functools

import jax
import jax.numpy as jnp
from jax.experimental import pallas as pl
from jax.experimental.pallas import tpu as pltpu


def _bigru_encoder_kernel(
    embf_ref,                 # (B, H)  embedded input at time t        (forward dir)
    embb_ref,                 # (B, H)  embedded input at time S-1-t    (backward dir)
    h0_ref,                   # (2, B, H) initial hidden (fwd, bwd)
    wif_ref, whf_ref,         # (H, 3H) forward  W_ih^T, W_hh^T  (gates fused: [r|z|n])
    bif_ref, bhf_ref,         # (1, 3H) forward  b_ih,  b_hh
    wib_ref, whb_ref,         # (H, 3H) backward W_ih^T, W_hh^T
    bib_ref, bhb_ref,         # (1, 3H) backward b_ih,  b_hh
    outf_ref,                 # (B, H) output block at time t      (forward hidden)
    outb_ref,                 # (B, H) output block at time S-1-t  (backward hidden)
    hn_ref,                   # (2, B, H) final hidden per direction
    hf_scr, hb_scr,           # (B, H) VMEM scratch: recurrent state per direction
    *, hidden,
):
    f32 = jnp.float32
    H = hidden
    t = pl.program_id(0)

    # Load the initial hidden state into the recurrent scratch on the first step.
    @pl.when(t == 0)
    def _init():
        hf_scr[...] = h0_ref[0].astype(f32)
        hb_scr[...] = h0_ref[1].astype(f32)

    def gru_cell(x, h_prev, wih_ref, whh_ref, bih_ref, bhh_ref):
        # Fused input / hidden projections: (B, H) @ (H, 3H) on the MXU.
        gi = jnp.dot(x, wih_ref[...], preferred_element_type=f32) + bih_ref[...]
        gh = jnp.dot(h_prev, whh_ref[...], preferred_element_type=f32) + bhh_ref[...]
        r = jax.nn.sigmoid(gi[:, :H] + gh[:, :H])
        z = jax.nn.sigmoid(gi[:, H:2 * H] + gh[:, H:2 * H])
        n = jnp.tanh(gi[:, 2 * H:] + r * gh[:, 2 * H:])
        return (1.0 - z) * n + z * h_prev

    hf_new = gru_cell(embf_ref[...].astype(f32), hf_scr[...],
                      wif_ref, whf_ref, bif_ref, bhf_ref)
    hb_new = gru_cell(embb_ref[...].astype(f32), hb_scr[...],
                      wib_ref, whb_ref, bib_ref, bhb_ref)

    hf_scr[...] = hf_new
    hb_scr[...] = hb_new

    # Seq-major outputs, written in their final layout (no wrapper transpose needed).
    outf_ref[...] = hf_new.astype(outf_ref.dtype)
    outb_ref[...] = hb_new.astype(outb_ref.dtype)

    # h_n block is resident across the whole grid (constant index map); last write wins.
    hn_ref[0] = hf_new.astype(hn_ref.dtype)
    hn_ref[1] = hb_new.astype(hn_ref.dtype)


def encoder_forward(x_tokens, h0, params):
    """Forward of Encoder (embedding + bidirectional GRU).

    Args:
      x_tokens: (S, B) int32 token ids.
      h0:       (2, B, H) initial hidden state (fwd, bwd).
      params:   dict with 'embed' (V, H) and PyTorch-convention GRU weights per direction.

    Returns:
      output: (S, B, 2H) — [forward | backward] hidden at every time step.
      h_n:    (2, B, H)  — final hidden state per direction.
    """
    S, B = x_tokens.shape
    H = h0.shape[-1]

    # Bulk embedding gather for all S*B tokens (one XLA gather, amortizes DMA overhead).
    emb = params["embed"][x_tokens].astype(jnp.float32)          # (S, B, H)

    # Pre-transpose / reshape GRU weights: fused (H, 3H) projections, gate order [r|z|n].
    wih_f = params["W_ih_f"].T                                    # (H, 3H)
    whh_f = params["W_hh_f"].T                                    # (H, 3H)
    wih_b = params["W_ih_b"].T
    whh_b = params["W_hh_b"].T
    bih_f = params["b_ih_f"].reshape(1, 3 * H)
    bhh_f = params["b_hh_f"].reshape(1, 3 * H)
    bih_b = params["b_ih_b"].reshape(1, 3 * H)
    bhh_b = params["b_hh_b"].reshape(1, 3 * H)

    # BlockSpecs: forward direction reads time t, backward reads time S-1-t of the same
    # embedded tensor; weights/biases are constant-index (loaded once, revisited).
    seq_fwd = pl.BlockSpec((None, B, H), lambda t: (t, 0, 0))
    seq_bwd = pl.BlockSpec((None, B, H), lambda t: (S - 1 - t, 0, 0))
    h0_spec = pl.BlockSpec((2, B, H), lambda t: (0, 0, 0))
    w_spec = pl.BlockSpec((H, 3 * H), lambda t: (0, 0))
    b_spec = pl.BlockSpec((1, 3 * H), lambda t: (0, 0))

    in_specs = [
        seq_fwd, seq_bwd, h0_spec,
        w_spec, w_spec, b_spec, b_spec,     # forward  W_ih^T, W_hh^T, b_ih, b_hh
        w_spec, w_spec, b_spec, b_spec,     # backward W_ih^T, W_hh^T, b_ih, b_hh
    ]
    out_specs = [
        seq_fwd,                             # forward outputs, written at time t
        seq_bwd,                             # backward outputs, written at time S-1-t
        pl.BlockSpec((2, B, H), lambda t: (0, 0, 0)),   # h_n (resident accumulator)
    ]
    out_shape = (
        jax.ShapeDtypeStruct((S, B, H), jnp.float32),
        jax.ShapeDtypeStruct((S, B, H), jnp.float32),
        jax.ShapeDtypeStruct((2, B, H), jnp.float32),
    )

    grid_spec = pltpu.PrefetchScalarGridSpec(
        num_scalar_prefetch=0,
        grid=(S,),                                      # time axis: sequential recurrence
        in_specs=in_specs,
        out_specs=out_specs,
        scratch_shapes=[pltpu.VMEM((B, H), jnp.float32),
                        pltpu.VMEM((B, H), jnp.float32)],
    )

    out_f, out_b, h_n = pl.pallas_call(
        functools.partial(_bigru_encoder_kernel, hidden=H),
        out_shape=out_shape,
        grid_spec=grid_spec,
        compiler_params=pltpu.CompilerParams(dimension_semantics=("arbitrary",)),
    )(emb, emb, h0,
      wih_f, whh_f, bih_f, bhh_f,
      wih_b, whh_b, bih_b, bhh_b)

    output = jnp.concatenate([out_f, out_b], axis=-1)   # (S, B, 2H)
    return output, h_n


def _reference_forward(x_tokens, h0, p):
    """Pure-JAX mirror of the PyTorch Encoder forward (bidirectional GRU)."""
    H = h0.shape[-1]
    emb = p["embed"][x_tokens]                          # (S, B, H)

    def run_dir(seq, h_init, Wih, Whh, bih, bhh):
        def step(h, xt):
            gi = xt @ Wih.T + bih
            gh = h @ Whh.T + bhh
            r = jax.nn.sigmoid(gi[:, :H] + gh[:, :H])
            z = jax.nn.sigmoid(gi[:, H:2 * H] + gh[:, H:2 * H])
            n = jnp.tanh(gi[:, 2 * H:] + r * gh[:, 2 * H:])
            hn = (1.0 - z) * n + z * h
            return hn, hn
        h_last, ys = jax.lax.scan(step, h_init, seq)
        return ys, h_last

    out_f, hT_f = run_dir(emb, h0[0], p["W_ih_f"], p["W_hh_f"], p["b_ih_f"], p["b_hh_f"])
    out_b_rev, hT_b = run_dir(emb[::-1], h0[1], p["W_ih_b"], p["W_hh_b"], p["b_ih_b"], p["b_hh_b"])
    out_b = out_b_rev[::-1]
    output = jnp.concatenate([out_f, out_b], axis=-1)   # (S, B, 2H)
    h_n = jnp.stack([hT_f, hT_b])                       # (2, B, H)
    return output, h_n


if __name__ == "__main__":
    S, B, H, V = 8, 2, 32, 16   # seq len, batch, hidden, vocab
    key = jax.random.PRNGKey(0)
    ks = jax.random.split(key, 12)
    init = lambda k, shape, scale: scale * jax.random.normal(k, shape, dtype=jnp.float32)

    params = {
        "embed":  init(ks[0], (V, H), 0.10),
        "W_ih_f": init(ks[1], (3 * H, H), 0.15),
        "W_hh_f": init(ks[2], (3 * H, H), 0.15),
        "b_ih_f": init(ks[3], (3 * H,), 0.05),
        "b_hh_f": init(ks[4], (3 * H,), 0.05),
        "W_ih_b": init(ks[5], (3 * H, H), 0.15),
        "W_hh_b": init(ks[6], (3 * H, H), 0.15),
        "b_ih_b": init(ks[7], (3 * H,), 0.05),
        "b_hh_b": init(ks[8], (3 * H,), 0.05),
    }

    x = jax.random.randint(ks[9], (S, B), 0, V, dtype=jnp.int32)
    h0 = init(ks[10], (2, B, H), 0.30)   # Encoder.initHidden would be zeros; nonzero is stricter

    outs = jax.jit(encoder_forward)(x, h0, params)
    jax.block_until_ready(outs)

    refs = _reference_forward(x, h0, params)
    for got, want in zip(outs, refs):
        assert got.shape == want.shape, (got.shape, want.shape)
        assert jnp.allclose(got, want, rtol=1e-2, atol=1e-2), float(jnp.max(jnp.abs(got - want)))

    print("KERNEL_OK")
</pallas_src>

<mosaic_0001>
module attributes {stable_mosaic.version = 11 : i64} {
  func.func @_bigru_encoder_kernel(%arg0: i32, %arg1: memref<1x2x32xf32, #tpu.memory_space<vmem>>, %arg2: memref<1x2x32xf32, #tpu.memory_space<vmem>>, %arg3: memref<2x2x32xf32, #tpu.memory_space<vmem>>, %arg4: memref<32x96xf32, #tpu.memory_space<vmem>>, %arg5: memref<32x96xf32, #tpu.memory_space<vmem>>, %arg6: memref<1x96xf32, #tpu.memory_space<vmem>>, %arg7: memref<1x96xf32, #tpu.memory_space<vmem>>, %arg8: memref<32x96xf32, #tpu.memory_space<vmem>>, %arg9: memref<32x96xf32, #tpu.memory_space<vmem>>, %arg10: memref<1x96xf32, #tpu.memory_space<vmem>>, %arg11: memref<1x96xf32, #tpu.memory_space<vmem>>, %arg12: memref<1x2x32xf32, #tpu.memory_space<vmem>>, %arg13: memref<1x2x32xf32, #tpu.memory_space<vmem>>, %arg14: memref<2x2x32xf32, #tpu.memory_space<vmem>>, %arg15: memref<2x32xf32, #tpu.memory_space<vmem>>, %arg16: memref<2x32xf32, #tpu.memory_space<vmem>>) attributes {dimension_semantics = [#tpu.dimension_semantics<arbitrary>], iteration_bounds = array<i64: 8>, scalar_prefetch = 0 : i64, scratch_operands = 2 : i64, tpu.core_type = #tpu.core_type<tc>, window_params = [{transform_indices = @transform_0, window_bounds = array<i64: 1, 2, 32>}, {transform_indices = @transform_1, window_bounds = array<i64: 1, 2, 32>}, {pipeline_mode = #tpu.pipeline_mode<synchronous>, transform_indices = @transform_2, window_bounds = array<i64: 2, 2, 32>}, {pipeline_mode = #tpu.pipeline_mode<synchronous>, transform_indices = @transform_3, window_bounds = array<i64: 32, 96>}, {pipeline_mode = #tpu.pipeline_mode<synchronous>, transform_indices = @transform_4, window_bounds = array<i64: 32, 96>}, {pipeline_mode = #tpu.pipeline_mode<synchronous>, transform_indices = @transform_5, window_bounds = array<i64: 1, 96>}, {pipeline_mode = #tpu.pipeline_mode<synchronous>, transform_indices = @transform_6, window_bounds = array<i64: 1, 96>}, {pipeline_mode = #tpu.pipeline_mode<synchronous>, transform_indices = @transform_7, window_bounds = array<i64: 32, 96>}, {pipeline_mode = #tpu.pipeline_mode<synchronous>, transform_indices = @transform_8, window_bounds = array<i64: 32, 96>}, {pipeline_mode = #tpu.pipeline_mode<synchronous>, transform_indices = @transform_9, window_bounds = array<i64: 1, 96>}, {pipeline_mode = #tpu.pipeline_mode<synchronous>, transform_indices = @transform_10, window_bounds = array<i64: 1, 96>}, {transform_indices = @transform_11, window_bounds = array<i64: 1, 2, 32>}, {transform_indices = @transform_12, window_bounds = array<i64: 1, 2, 32>}, {pipeline_mode = #tpu.pipeline_mode<synchronous>, transform_indices = @transform_13, window_bounds = array<i64: 2, 2, 32>}]} {
    %c0_i32 = arith.constant 0 : i32
    %0 = arith.cmpi eq, %arg0, %c0_i32 : i32
    %1 = arith.extui %0 : i1 to i32
    %c0_i32_0 = arith.constant 0 : i32
    %2 = arith.cmpi ne, %1, %c0_i32_0 : i32
    scf.if %2 {
      %c0_50 = arith.constant 0 : index
      %c0_51 = arith.constant 0 : index
      %c0_52 = arith.constant 0 : index
      %95 = vector.load %arg3[%c0_50, %c0_51, %c0_52] : memref<2x2x32xf32, #tpu.memory_space<vmem>>, vector<1x2x32xf32>
      %96 = vector.shape_cast %95 : vector<1x2x32xf32> to vector<2x32xf32>
      %c0_53 = arith.constant 0 : index
      %c0_54 = arith.constant 0 : index
      %97 = vector.load %arg15[%c0_53, %c0_54] : memref<2x32xf32, #tpu.memory_space<vmem>>, vector<2x32xf32>
      tpu.vector_store %arg15[%c0_53, %c0_54], %96 {strides = array<i32>} : memref<2x32xf32, #tpu.memory_space<vmem>>, vector<2x32xf32>,
      %c1_55 = arith.constant 1 : index
      %c0_56 = arith.constant 0 : index
      %c0_57 = arith.constant 0 : index
      %98 = vector.load %arg3[%c1_55, %c0_56, %c0_57] : memref<2x2x32xf32, #tpu.memory_space<vmem>>, vector<1x2x32xf32>
      %99 = vector.shape_cast %98 : vector<1x2x32xf32> to vector<2x32xf32>
      %c0_58 = arith.constant 0 : index
      %c0_59 = arith.constant 0 : index
      %100 = vector.load %arg16[%c0_58, %c0_59] : memref<2x32xf32, #tpu.memory_space<vmem>>, vector<2x32xf32>
      tpu.vector_store %arg16[%c0_58, %c0_59], %99 {strides = array<i32>} : memref<2x32xf32, #tpu.memory_space<vmem>>, vector<2x32xf32>,
    } else {
    }
    %c0 = arith.constant 0 : index
    %c0_1 = arith.constant 0 : index
    %c0_2 = arith.constant 0 : index
    %3 = vector.load %arg1[%c0, %c0_1, %c0_2] : memref<1x2x32xf32, #tpu.memory_space<vmem>>, vector<1x2x32xf32>
    %4 = vector.shape_cast %3 : vector<1x2x32xf32> to vector<2x32xf32>
    %c0_3 = arith.constant 0 : index
    %c0_4 = arith.constant 0 : index
    %5 = vector.load %arg15[%c0_3, %c0_4] : memref<2x32xf32, #tpu.memory_space<vmem>>, vector<2x32xf32>
    %c0_5 = arith.constant 0 : index
    %c0_6 = arith.constant 0 : index
    %6 = vector.load %arg4[%c0_5, %c0_6] : memref<32x96xf32, #tpu.memory_space<vmem>>, vector<32x96xf32>
    %cst = arith.constant dense<0.000000e+00> : vector<2x96xf32>
    %7 = tpu.matmul %4, %6, %cst {dimension_numbers = #tpu.dot_dimension_numbers<[1], [0], [0], [1], [0, 0, 1, 1], [], []>} : vector<2x32xf32>, vector<32x96xf32>, vector<2x96xf32> -> vector<2x96xf32>
    %c0_7 = arith.constant 0 : index
    %c0_8 = arith.constant 0 : index
    %8 = vector.load %arg6[%c0_7, %c0_8] : memref<1x96xf32, #tpu.memory_space<vmem>>, vector<1x96xf32>
    %9 = vector.broadcast %8 : vector<1x96xf32> to vector<2x96xf32>
    %10 = arith.addf %7, %9 : vector<2x96xf32>
    %c0_9 = arith.constant 0 : index
    %c0_10 = arith.constant 0 : index
    %11 = vector.load %arg5[%c0_9, %c0_10] : memref<32x96xf32, #tpu.memory_space<vmem>>, vector<32x96xf32>
    %cst_11 = arith.constant dense<0.000000e+00> : vector<2x96xf32>
    %12 = tpu.matmul %5, %11, %cst_11 {dimension_numbers = #tpu.dot_dimension_numbers<[1], [0], [0], [1], [0, 0, 1, 1], [], []>} : vector<2x32xf32>, vector<32x96xf32>, vector<2x96xf32> -> vector<2x96xf32>
    %c0_12 = arith.constant 0 : index
    %c0_13 = arith.constant 0 : index
    %13 = vector.load %arg7[%c0_12, %c0_13] : memref<1x96xf32, #tpu.memory_space<vmem>>, vector<1x96xf32>
    %14 = vector.broadcast %13 : vector<1x96xf32> to vector<2x96xf32>
    %15 = arith.addf %12, %14 : vector<2x96xf32>
    %16 = vector.extract_strided_slice %10 {offsets = [0, 0], sizes = [2, 32], strides = [1, 1]} : vector<2x96xf32> to vector<2x32xf32>
    %17 = vector.extract_strided_slice %15 {offsets = [0, 0], sizes = [2, 32], strides = [1, 1]} : vector<2x96xf32> to vector<2x32xf32>
    %18 = arith.addf %16, %17 : vector<2x32xf32>
    %19 = arith.negf %18 : vector<2x32xf32>
    %20 = math.exp %19 : vector<2x32xf32>
    %cst_14 = arith.constant 1.000000e+00 : f32
    %21 = vector.broadcast %cst_14 : f32 to vector<2x32xf32>
    %22 = arith.addf %21, %20 : vector<2x32xf32>
    %23 = arith.divf %21, %22 : vector<2x32xf32>
    %24 = vector.extract_strided_slice %10 {offsets = [0, 32], sizes = [2, 32], strides = [1, 1]} : vector<2x96xf32> to vector<2x32xf32>
    %25 = vector.extract_strided_slice %15 {offsets = [0, 32], sizes = [2, 32], strides = [1, 1]} : vector<2x96xf32> to vector<2x32xf32>
    %26 = arith.addf %24, %25 : vector<2x32xf32>
    %27 = arith.negf %26 : vector<2x32xf32>
    %28 = math.exp %27 : vector<2x32xf32>
    %cst_15 = arith.constant 1.000000e+00 : f32
    %29 = vector.broadcast %cst_15 : f32 to vector<2x32xf32>
    %30 = arith.addf %29, %28 : vector<2x32xf32>
    %31 = arith.divf %29, %30 : vector<2x32xf32>
    %32 = vector.extract_strided_slice %10 {offsets = [0, 64], sizes = [2, 32], strides = [1, 1]} : vector<2x96xf32> to vector<2x32xf32>
    %33 = vector.extract_strided_slice %15 {offsets = [0, 64], sizes = [2, 32], strides = [1, 1]} : vector<2x96xf32> to vector<2x32xf32>
    %34 = arith.mulf %23, %33 : vector<2x32xf32>
    %35 = arith.addf %32, %34 : vector<2x32xf32>
    %36 = math.tanh %35 : vector<2x32xf32>
    %cst_16 = arith.constant 1.000000e+00 : f32
    %37 = vector.broadcast %cst_16 : f32 to vector<2x32xf32>
    %38 = arith.subf %37, %31 : vector<2x32xf32>
    %39 = arith.mulf %38, %36 : vector<2x32xf32>
    %40 = arith.mulf %31, %5 : vector<2x32xf32>
    %41 = arith.addf %39, %40 : vector<2x32xf32>
    %c0_17 = arith.constant 0 : index
    %c0_18 = arith.constant 0 : index
    %c0_19 = arith.constant 0 : index
    %42 = vector.load %arg2[%c0_17, %c0_18, %c0_19] : memref<1x2x32xf32, #tpu.memory_space<vmem>>, vector<1x2x32xf32>
    %43 = vector.shape_cast %42 : vector<1x2x32xf32> to vector<2x32xf32>
    %c0_20 = arith.constant 0 : index
    %c0_21 = arith.constant 0 : index
    %44 = vector.load %arg16[%c0_20, %c0_21] : memref<2x32xf32, #tpu.memory_space<vmem>>, vector<2x32xf32>
    %c0_22 = arith.constant 0 : index
    %c0_23 = arith.constant 0 : index
    %45 = vector.load %arg8[%c0_22, %c0_23] : memref<32x96xf32, #tpu.memory_space<vmem>>, vector<32x96xf32>
    %cst_24 = arith.constant dense<0.000000e+00> : vector<2x96xf32>
    %46 = tpu.matmul %43, %45, %cst_24 {dimension_numbers = #tpu.dot_dimension_numbers<[1], [0], [0], [1], [0, 0, 1, 1], [], []>} : vector<2x32xf32>, vector<32x96xf32>, vector<2x96xf32> -> vector<2x96xf32>
    %c0_25 = arith.constant 0 : index
    %c0_26 = arith.constant 0 : index
    %47 = vector.load %arg10[%c0_25, %c0_26] : memref<1x96xf32, #tpu.memory_space<vmem>>, vector<1x96xf32>
    %48 = vector.broadcast %47 : vector<1x96xf32> to vector<2x96xf32>
    %49 = arith.addf %46, %48 : vector<2x96xf32>
    %c0_27 = arith.constant 0 : index
    %c0_28 = arith.constant 0 : index
    %50 = vector.load %arg9[%c0_27, %c0_28] : memref<32x96xf32, #tpu.memory_space<vmem>>, vector<32x96xf32>
    %cst_29 = arith.constant dense<0.000000e+00> : vector<2x96xf32>
    %51 = tpu.matmul %44, %50, %cst_29 {dimension_numbers = #tpu.dot_dimension_numbers<[1], [0], [0], [1], [0, 0, 1, 1], [], []>} : vector<2x32xf32>, vector<32x96xf32>, vector<2x96xf32> -> vector<2x96xf32>
    %c0_30 = arith.constant 0 : index
    %c0_31 = arith.constant 0 : index
    %52 = vector.load %arg11[%c0_30, %c0_31] : memref<1x96xf32, #tpu.memory_space<vmem>>, vector<1x96xf32>
    %53 = vector.broadcast %52 : vector<1x96xf32> to vector<2x96xf32>
    %54 = arith.addf %51, %53 : vector<2x96xf32>
    %55 = vector.extract_strided_slice %49 {offsets = [0, 0], sizes = [2, 32], strides = [1, 1]} : vector<2x96xf32> to vector<2x32xf32>
    %56 = vector.extract_strided_slice %54 {offsets = [0, 0], sizes = [2, 32], strides = [1, 1]} : vector<2x96xf32> to vector<2x32xf32>
    %57 = arith.addf %55, %56 : vector<2x32xf32>
    %58 = arith.negf %57 : vector<2x32xf32>
    %59 = math.exp %58 : vector<2x32xf32>
    %cst_32 = arith.constant 1.000000e+00 : f32
    %60 = vector.broadcast %cst_32 : f32 to vector<2x32xf32>
    %61 = arith.addf %60, %59 : vector<2x32xf32>
    %62 = arith.divf %60, %61 : vector<2x32xf32>
    %63 = vector.extract_strided_slice %49 {offsets = [0, 32], sizes = [2, 32], strides = [1, 1]} : vector<2x96xf32> to vector<2x32xf32>
    %64 = vector.extract_strided_slice %54 {offsets = [0, 32], sizes = [2, 32], strides = [1, 1]} : vector<2x96xf32> to vector<2x32xf32>
    %65 = arith.addf %63, %64 : vector<2x32xf32>
    %66 = arith.negf %65 : vector<2x32xf32>
    %67 = math.exp %66 : vector<2x32xf32>
    %cst_33 = arith.constant 1.000000e+00 : f32
    %68 = vector.broadcast %cst_33 : f32 to vector<2x32xf32>
    %69 = arith.addf %68, %67 : vector<2x32xf32>
    %70 = arith.divf %68, %69 : vector<2x32xf32>
    %71 = vector.extract_strided_slice %49 {offsets = [0, 64], sizes = [2, 32], strides = [1, 1]} : vector<2x96xf32> to vector<2x32xf32>
    %72 = vector.extract_strided_slice %54 {offsets = [0, 64], sizes = [2, 32], strides = [1, 1]} : vector<2x96xf32> to vector<2x32xf32>
    %73 = arith.mulf %62, %72 : vector<2x32xf32>
    %74 = arith.addf %71, %73 : vector<2x32xf32>
    %75 = math.tanh %74 : vector<2x32xf32>
    %cst_34 = arith.constant 1.000000e+00 : f32
    %76 = vector.broadcast %cst_34 : f32 to vector<2x32xf32>
    %77 = arith.subf %76, %70 : vector<2x32xf32>
    %78 = arith.mulf %77, %75 : vector<2x32xf32>
    %79 = arith.mulf %70, %44 : vector<2x32xf32>
    %80 = arith.addf %78, %79 : vector<2x32xf32>
    %c0_35 = arith.constant 0 : index
    %c0_36 = arith.constant 0 : index
    %81 = vector.load %arg15[%c0_35, %c0_36] : memref<2x32xf32, #tpu.memory_space<vmem>>, vector<2x32xf32>
    tpu.vector_store %arg15[%c0_35, %c0_36], %41 {strides = array<i32>} : memref<2x32xf32, #tpu.memory_space<vmem>>, vector<2x32xf32>,
    %c0_37 = arith.constant 0 : index
    %c0_38 = arith.constant 0 : index
    %82 = vector.load %arg16[%c0_37, %c0_38] : memref<2x32xf32, #tpu.memory_space<vmem>>, vector<2x32xf32>
    tpu.vector_store %arg16[%c0_37, %c0_38], %80 {strides = array<i32>} : memref<2x32xf32, #tpu.memory_space<vmem>>, vector<2x32xf32>,
    %c0_39 = arith.constant 0 : index
    %c0_40 = arith.constant 0 : index
    %c0_41 = arith.constant 0 : index
    %83 = vector.load %arg12[%c0_39, %c0_40, %c0_41] : memref<1x2x32xf32, #tpu.memory_space<vmem>>, vector<1x2x32xf32>
    %84 = vector.shape_cast %83 : vector<1x2x32xf32> to vector<2x32xf32>
    %85 = vector.shape_cast %41 : vector<2x32xf32> to vector<1x2x32xf32>
    tpu.vector_store %arg12[%c0_39, %c0_40, %c0_41], %85 {strides = array<i32>} : memref<1x2x32xf32, #tpu.memory_space<vmem>>, vector<1x2x32xf32>,
    %c0_42 = arith.constant 0 : index
    %c0_43 = arith.constant 0 : index
    %c0_44 = arith.constant 0 : index
    %86 = vector.load %arg13[%c0_42, %c0_43, %c0_44] : memref<1x2x32xf32, #tpu.memory_space<vmem>>, vector<1x2x32xf32>
    %87 = vector.shape_cast %86 : vector<1x2x32xf32> to vector<2x32xf32>
    %88 = vector.shape_cast %80 : vector<2x32xf32> to vector<1x2x32xf32>
    tpu.vector_store %arg13[%c0_42, %c0_43, %c0_44], %88 {strides = array<i32>} : memref<1x2x32xf32, #tpu.memory_space<vmem>>, vector<1x2x32xf32>,
    %c0_45 = arith.constant 0 : index
    %c0_46 = arith.constant 0 : index
    %c0_47 = arith.constant 0 : index
    %89 = vector.load %arg14[%c0_45, %c0_46, %c0_47] : memref<2x2x32xf32, #tpu.memory_space<vmem>>, vector<1x2x32xf32>
    %90 = vector.shape_cast %89 : vector<1x2x32xf32> to vector<2x32xf32>
    %91 = vector.shape_cast %41 : vector<2x32xf32> to vector<1x2x32xf32>
    tpu.vector_store %arg14[%c0_45, %c0_46, %c0_47], %91 {strides = array<i32>} : memref<2x2x32xf32, #tpu.memory_space<vmem>>, vector<1x2x32xf32>,
    %c1 = arith.constant 1 : index
    %c0_48 = arith.constant 0 : index
    %c0_49 = arith.constant 0 : index
    %92 = vector.load %arg14[%c1, %c0_48, %c0_49] : memref<2x2x32xf32, #tpu.memory_space<vmem>>, vector<1x2x32xf32>
    %93 = vector.shape_cast %92 : vector<1x2x32xf32> to vector<2x32xf32>
    %94 = vector.shape_cast %80 : vector<2x32xf32> to vector<1x2x32xf32>
    tpu.vector_store %arg14[%c1, %c0_48, %c0_49], %94 {strides = array<i32>} : memref<2x2x32xf32, #tpu.memory_space<vmem>>, vector<1x2x32xf32>,
    return
  }
  func.func @transform_0(%arg0: i32) -> (i32, i32, i32) {
    %c0_i32 = arith.constant 0 : i32
    %c0_i32_0 = arith.constant 0 : i32
    %c0_i32_1 = arith.constant 0 : i32
    return %arg0, %c0_i32, %c0_i32_0 : i32, i32, i32
  }
  func.func @transform_1(%arg0: i32) -> (i32, i32, i32) {
    %c7_i32 = arith.constant 7 : i32
    %0 = arith.subi %c7_i32, %arg0 : i32
    %c0_i32 = arith.constant 0 : i32
    %c0_i32_0 = arith.constant 0 : i32
    %c0_i32_1 = arith.constant 0 : i32
    return %0, %c0_i32, %c0_i32_0 : i32, i32, i32
  }
  func.func @transform_2(%arg0: i32) -> (i32, i32, i32) {
    %c0_i32 = arith.constant 0 : i32
    %c0_i32_0 = arith.constant 0 : i32
    %c0_i32_1 = arith.constant 0 : i32
    %c0_i32_2 = arith.constant 0 : i32
    return %c0_i32, %c0_i32_0, %c0_i32_1 : i32, i32, i32
  }
  func.func @transform_3(%arg0: i32) -> (i32, i32) {
    %c0_i32 = arith.constant 0 : i32
    %c0_i32_0 = arith.constant 0 : i32
    %c0_i32_1 = arith.constant 0 : i32
    return %c0_i32, %c0_i32_0 : i32, i32
  }
  func.func @transform_4(%arg0: i32) -> (i32, i32) {
    %c0_i32 = arith.constant 0 : i32
    %c0_i32_0 = arith.constant 0 : i32
    %c0_i32_1 = arith.constant 0 : i32
    return %c0_i32, %c0_i32_0 : i32, i32
  }
  func.func @transform_5(%arg0: i32) -> (i32, i32) {
    %c0_i32 = arith.constant 0 : i32
    %c0_i32_0 = arith.constant 0 : i32
    %c0_i32_1 = arith.constant 0 : i32
    return %c0_i32, %c0_i32_0 : i32, i32
  }
  func.func @transform_6(%arg0: i32) -> (i32, i32) {
    %c0_i32 = arith.constant 0 : i32
    %c0_i32_0 = arith.constant 0 : i32
    %c0_i32_1 = arith.constant 0 : i32
    return %c0_i32, %c0_i32_0 : i32, i32
  }
  func.func @transform_7(%arg0: i32) -> (i32, i32) {
    %c0_i32 = arith.constant 0 : i32
    %c0_i32_0 = arith.constant 0 : i32
    %c0_i32_1 = arith.constant 0 : i32
    return %c0_i32, %c0_i32_0 : i32, i32
  }
  func.func @transform_8(%arg0: i32) -> (i32, i32) {
    %c0_i32 = arith.constant 0 : i32
    %c0_i32_0 = arith.constant 0 : i32
    %c0_i32_1 = arith.constant 0 : i32
    return %c0_i32, %c0_i32_0 : i32, i32
  }
  func.func @transform_9(%arg0: i32) -> (i32, i32) {
    %c0_i32 = arith.constant 0 : i32
    %c0_i32_0 = arith.constant 0 : i32
    %c0_i32_1 = arith.constant 0 : i32
    return %c0_i32, %c0_i32_0 : i32, i32
  }
  func.func @transform_10(%arg0: i32) -> (i32, i32) {
    %c0_i32 = arith.constant 0 : i32
    %c0_i32_0 = arith.constant 0 : i32
    %c0_i32_1 = arith.constant 0 : i32
    return %c0_i32, %c0_i32_0 : i32, i32
  }
  func.func @transform_11(%arg0: i32) -> (i32, i32, i32) {
    %c0_i32 = arith.constant 0 : i32
    %c0_i32_0 = arith.constant 0 : i32
    %c0_i32_1 = arith.constant 0 : i32
    return %arg0, %c0_i32, %c0_i32_0 : i32, i32, i32
  }
  func.func @transform_12(%arg0: i32) -> (i32, i32, i32) {
    %c7_i32 = arith.constant 7 : i32
    %0 = arith.subi %c7_i32, %arg0 : i32
    %c0_i32 = arith.constant 0 : i32
    %c0_i32_0 = arith.constant 0 : i32
    %c0_i32_1 = arith.constant 0 : i32
    return %0, %c0_i32, %c0_i32_0 : i32, i32, i32
  }
  func.func @transform_13(%arg0: i32) -> (i32, i32, i32) {
    %c0_i32 = arith.constant 0 : i32
    %c0_i32_0 = arith.constant 0 : i32
    %c0_i32_1 = arith.constant 0 : i32
    %c0_i32_2 = arith.constant 0 : i32
    return %c0_i32, %c0_i32_0, %c0_i32_1 : i32, i32, i32
  }
}

</mosaic_0001>

<llo_original>
// kernel: encoder_forward.1
$region0: #{encoder_forward.1}
  #allocation0 [shape = 'u32[]', space=smem, size = 0x4, offset = 0x4, fixed_abs, tag = 'smem constant byte address 0x4 - core index']
  #allocation1 [shape = 'u32[144,128]{1,0:T(1,128)}', space=vmem, size = 0x12000, scoped, tag = 'internal scratch']
  #allocation2 [shape = 'f32[2,32]{1,0:T(2,128)}', space=vmem, size = 0x400, scoped, tag = 'scratch operand']
  #allocation3 [shape = 'f32[2,32]{1,0:T(2,128)}', space=vmem, size = 0x400, scoped, tag = 'scratch operand']
  %s0 = inlined_call_operand.vmem [shape: f32[8,2,32], index: 0, kind: input, shape index: {}, may-alias: {0,1}]
  %s1 = inlined_call_operand.vmem [shape: f32[8,2,32], index: 1, kind: input, shape index: {}, may-alias: {0,1}]
  %s2 = inlined_call_operand.vmem [shape: f32[2,2,32], index: 2, kind: input, shape index: {}]
  %s3 = inlined_call_operand.vmem [shape: f32[32,96], index: 3, kind: input, shape index: {}]
  %s4 = inlined_call_operand.vmem [shape: f32[32,96], index: 4, kind: input, shape index: {}]
  %s5 = inlined_call_operand.vmem [shape: f32[1,96], index: 5, kind: input, shape index: {}]
  %s6 = inlined_call_operand.vmem [shape: f32[1,96], index: 6, kind: input, shape index: {}]
  %s7 = inlined_call_operand.vmem [shape: f32[32,96], index: 7, kind: input, shape index: {}]
  %s8 = inlined_call_operand.vmem [shape: f32[32,96], index: 8, kind: input, shape index: {}]
  %s9 = inlined_call_operand.vmem [shape: f32[1,96], index: 9, kind: input, shape index: {}]
  %s10 = inlined_call_operand.vmem [shape: f32[1,96], index: 10, kind: input, shape index: {}]
  %s11 = inlined_call_operand.vmem [shape: f32[8,2,32], index: 11, kind: output, shape index: {0}]
  %s12 = inlined_call_operand.vmem [shape: f32[8,2,32], index: 12, kind: output, shape index: {1}]
  %s13 = inlined_call_operand.hbm [shape: f32[2,2,32], index: 13, kind: output, shape index: {2}]
  %14 = xla_tuple %s11, %s12, %s13
  %s15 = sld [smem:[#allocation0]]
  $region97: #{encoder_forward.1} parent=0
    _
  %s17 = ssub.s32 1, %s15
  %s18 = scalar_select 0, %s17, %s15
  $region1: #{encoder_forward.1} parent=0
    #allocation4 [shape = 'u8[2048]{0}', space=vmem, size = 0x800, scoped, tag = 'output window, operand 2, single buffered']
    #allocation5 [shape = 's32[2]{0}', space=sflag, size = 0x8, scoped, tag = 'scoped memory for encoder_forward.1']
    %19 = vsyncpa [#allocation5], 0
    loop: start=0, step=1, limit=10
    $region2: #{encoder_forward.1} parent=1 // loop_pre_header
      _
    $region3: #{encoder_forward.1} parent=1 // loop_header
      %s21 = sphi 0, %s25
      %p22 = scmp.ge.s32.totalorder %s21, 10
      %s31 = sphi 0, %s33
      %s34 = sphi 0, %s31
      %s35 = sphi 0, %s34
      %s51 = sphi 0, %s35
      %s59 = sphi 0, %s61
      %s62 = sphi 0, %s59
      %s63 = sphi 0, %s62
      %s79 = sphi 0, %s63
      %s83 = sphi 0, %s83
      %s85 = sphi 0, %s83
      %s86 = sphi 0, %s85
      %s100 = sphi 0, %s86
      %s104 = sphi 0, %s104
      %s106 = sphi 0, %s104
      %s107 = sphi 0, %s106
      %s121 = sphi 0, %s107
      %s125 = sphi 0, %s125
      %s127 = sphi 0, %s125
      %s128 = sphi 0, %s127
      %s142 = sphi 0, %s128
      %s146 = sphi 0, %s146
      %s148 = sphi 0, %s146
      %s149 = sphi 0, %s148
      %s163 = sphi 0, %s149
      %s167 = sphi 0, %s167
      %s169 = sphi 0, %s167
      %s170 = sphi 0, %s169
      %s184 = sphi 0, %s170
      %s188 = sphi 0, %s188
      %s190 = sphi 0, %s188
      %s191 = sphi 0, %s190
      %s205 = sphi 0, %s191
      %s209 = sphi 0, %s209
      %s211 = sphi 0, %s209
      %s212 = sphi 0, %s211
      %s226 = sphi 0, %s212
      %s230 = sphi 0, %s230
      %s232 = sphi 0, %s230
      %s233 = sphi 0, %s232
      %s247 = sphi 0, %s233
      %s251 = sphi 0, %s251
      %s253 = sphi 0, %s251
      %s254 = sphi 0, %s253
      %s268 = sphi 0, %s254
      %s274 = sphi 0, %s276
      %s277 = sphi 0, %s274
      %s278 = sphi 0, %s277
      %s294 = sphi 0, %s278
      %s302 = sphi 0, %s304
      %s305 = sphi 0, %s302
      %s306 = sphi 0, %s305
      %s322 = sphi 0, %s306
      %s326 = sphi 0, %s326
      %s328 = sphi 0, %s326
      %s329 = sphi 0, %s328
      %s343 = sphi 0, %s329
    $region4: #{encoder_forward.1} parent=1 // loop_header_branch
      %24 = sbr.rel (%p22) target = $region8
    $region5: #{encoder_forward.1} parent=1 // loop_body
      %s26 = ssub.s32 %s21, 1
      %s27 = ssub.s32 %s21, 2
      %s28 = sadd.s32 %s21, 1
      %s29 = ssub.s32 %s21, %s28
      %p30 = scmp.eq.s32.totalorder %s29, 0
      %s32 = sadd.s32 %s31, 1
      %s33 = scalar_select %p30, %s31, %s32
      %p36 = pneg %p30
      %p37 = scmp.eq.s32.totalorder %s21, 7
      %p38 = por %p36, %p37
      %p39 = scmp.ne.s32.totalorder %s31, %s34
      %p40 = scmp.eq.s32.totalorder %s21, 0
      %p41 = por %p39, %p40
      %p42 = scmp.ne.s32.totalorder %s31, %s34
      %p43 = scmp.eq.s32.totalorder %s26, 7
      %p44 = por %p42, %p43
      %p45 = scmp.ne.s32.totalorder %s34, %s35
      %p46 = scmp.eq.s32.totalorder %s26, 0
      %p47 = por %p45, %p46
      %p48 = scmp.ne.s32.totalorder %s34, %s35
      %p49 = scmp.eq.s32.totalorder %s27, 7
      %p50 = por %p48, %p49
      %p52 = scmp.ne.s32.totalorder %s35, %s51
      %p53 = scmp.eq.s32.totalorder %s27, 0
      %p54 = por %p52, %p53
      %s55 = ssub.s32 7, %s21
      %s56 = ssub.s32 7, %s28
      %s57 = ssub.s32 %s55, %s56
      %p58 = scmp.eq.s32.totalorder %s57, 0
      %s60 = sadd.s32 %s59, 1
      %s61 = scalar_select %p58, %s59, %s60
      %p64 = pneg %p58
      %p65 = scmp.eq.s32.totalorder %s21, 7
      %p66 = por %p64, %p65
      %p67 = scmp.ne.s32.totalorder %s59, %s62
      %p68 = scmp.eq.s32.totalorder %s21, 0
      %p69 = por %p67, %p68
      %p70 = scmp.ne.s32.totalorder %s59, %s62
      %p71 = scmp.eq.s32.totalorder %s26, 7
      %p72 = por %p70, %p71
      %p73 = scmp.ne.s32.totalorder %s62, %s63
      %p74 = scmp.eq.s32.totalorder %s26, 0
      %p75 = por %p73, %p74
      %p76 = scmp.ne.s32.totalorder %s62, %s63
      %p77 = scmp.eq.s32.totalorder %s27, 7
      %p78 = por %p76, %p77
      %p80 = scmp.ne.s32.totalorder %s63, %s79
      %p81 = scmp.eq.s32.totalorder %s27, 0
      %p82 = por %p80, %p81
      %s84 = sadd.s32 %s83, 1
      %p87 = scmp.eq.s32.totalorder %s21, 7
      %p88 = scmp.ne.s32.totalorder %s83, %s85
      %p89 = scmp.eq.s32.totalorder %s21, 0
      %p90 = por %p88, %p89
      %p91 = scmp.ne.s32.totalorder %s83, %s85
      %p92 = scmp.eq.s32.totalorder %s26, 7
      %p93 = por %p91, %p92
      %p94 = scmp.ne.s32.totalorder %s85, %s86
      %p95 = scmp.eq.s32.totalorder %s26, 0
      %p96 = por %p94, %p95
      %p97 = scmp.ne.s32.totalorder %s85, %s86
      %p98 = scmp.eq.s32.totalorder %s27, 7
      %p99 = por %p97, %p98
      %p101 = scmp.ne.s32.totalorder %s86, %s100
      %p102 = scmp.eq.s32.totalorder %s27, 0
      %p103 = por %p101, %p102
      %s105 = sadd.s32 %s104, 1
      %p108 = scmp.eq.s32.totalorder %s21, 7
      %p109 = scmp.ne.s32.totalorder %s104, %s106
      %p110 = scmp.eq.s32.totalorder %s21, 0
      %p111 = por %p109, %p110
      %p112 = scmp.ne.s32.totalorder %s104, %s106
      %p113 = scmp.eq.s32.totalorder %s26, 7
      %p114 = por %p112, %p113
      %p115 = scmp.ne.s32.totalorder %s106, %s107
      %p116 = scmp.eq.s32.totalorder %s26, 0
      %p117 = por %p115, %p116
      %p118 = scmp.ne.s32.totalorder %s106, %s107
      %p119 = scmp.eq.s32.totalorder %s27, 7
      %p120 = por %p118, %p119
      %p122 = scmp.ne.s32.totalorder %s107, %s121
      %p123 = scmp.eq.s32.totalorder %s27, 0
      %p124 = por %p122, %p123
      %s126 = sadd.s32 %s125, 1
      %p129 = scmp.eq.s32.totalorder %s21, 7
      %p130 = scmp.ne.s32.totalorder %s125, %s127
      %p131 = scmp.eq.s32.totalorder %s21, 0
      %p132 = por %p130, %p131
      %p133 = scmp.ne.s32.totalorder %s125, %s127
      %p134 = scmp.eq.s32.totalorder %s26, 7
      %p135 = por %p133, %p134
      %p136 = scmp.ne.s32.totalorder %s127, %s128
      %p137 = scmp.eq.s32.totalorder %s26, 0
      %p138 = por %p136, %p137
      %p139 = scmp.ne.s32.totalorder %s127, %s128
      %p140 = scmp.eq.s32.totalorder %s27, 7
      %p141 = por %p139, %p140
      %p143 = scmp.ne.s32.totalorder %s128, %s142
      %p144 = scmp.eq.s32.totalorder %s27, 0
      %p145 = por %p143, %p144
      %s147 = sadd.s32 %s146, 1
      %p150 = scmp.eq.s32.totalorder %s21, 7
      %p151 = scmp.ne.s32.totalorder %s146, %s148
      %p152 = scmp.eq.s32.totalorder %s21, 0
      %p153 = por %p151, %p152
      %p154 = scmp.ne.s32.totalorder %s146, %s148
      %p155 = scmp.eq.s32.totalorder %s26, 7
      %p156 = por %p154, %p155
      %p157 = scmp.ne.s32.totalorder %s148, %s149
      %p158 = scmp.eq.s32.totalorder %s26, 0
      %p159 = por %p157, %p158
      %p160 = scmp.ne.s32.totalorder %s148, %s149
      %p161 = scmp.eq.s32.totalorder %s27, 7
      %p162 = por %p160, %p161
      %p164 = scmp.ne.s32.totalorder %s149, %s163
      %p165 = scmp.eq.s32.totalorder %s27, 0
      %p166 = por %p164, %p165
      %s168 = sadd.s32 %s167, 1
      %p171 = scmp.eq.s32.totalorder %s21, 7
      %p172 = scmp.ne.s32.totalorder %s167, %s169
      %p173 = scmp.eq.s32.totalorder %s21, 0
      %p174 = por %p172, %p173
      %p175 = scmp.ne.s32.totalorder %s167, %s169
      %p176 = scmp.eq.s32.totalorder %s26, 7
      %p177 = por %p175, %p176
      %p178 = scmp.ne.s32.totalorder %s169, %s170
      %p179 = scmp.eq.s32.totalorder %s26, 0
      %p180 = por %p178, %p179
      %p181 = scmp.ne.s32.totalorder %s169, %s170
      %p182 = scmp.eq.s32.totalorder %s27, 7
      %p183 = por %p181, %p182
      %p185 = scmp.ne.s32.totalorder %s170, %s184
      %p186 = scmp.eq.s32.totalorder %s27, 0
      %p187 = por %p185, %p186
      %s189 = sadd.s32 %s188, 1
      %p192 = scmp.eq.s32.totalorder %s21, 7
      %p193 = scmp.ne.s32.totalorder %s188, %s190
      %p194 = scmp.eq.s32.totalorder %s21, 0
      %p195 = por %p193, %p194
      %p196 = scmp.ne.s32.totalorder %s188, %s190
      %p197 = scmp.eq.s32.totalorder %s26, 7
      %p198 = por %p196, %p197
      %p199 = scmp.ne.s32.totalorder %s190, %s191
      %p200 = scmp.eq.s32.totalorder %s26, 0
      %p201 = por %p199, %p200
      %p202 = scmp.ne.s32.totalorder %s190, %s191
      %p203 = scmp.eq.s32.totalorder %s27, 7
      %p204 = por %p202, %p203
      %p206 = scmp.ne.s32.totalorder %s191, %s205
      %p207 = scmp.eq.s32.totalorder %s27, 0
      %p208 = por %p206, %p207
      %s210 = sadd.s32 %s209, 1
      %p213 = scmp.eq.s32.totalorder %s21, 7
      %p214 = scmp.ne.s32.totalorder %s209, %s211
      %p215 = scmp.eq.s32.totalorder %s21, 0
      %p216 = por %p214, %p215
      %p217 = scmp.ne.s32.totalorder %s209, %s211
      %p218 = scmp.eq.s32.totalorder %s26, 7
      %p219 = por %p217, %p218
      %p220 = scmp.ne.s32.totalorder %s211, %s212
      %p221 = scmp.eq.s32.totalorder %s26, 0
      %p222 = por %p220, %p221
      %p223 = scmp.ne.s32.totalorder %s211, %s212
      %p224 = scmp.eq.s32.totalorder %s27, 7
      %p225 = por %p223, %p224
      %p227 = scmp.ne.s32.totalorder %s212, %s226
      %p228 = scmp.eq.s32.totalorder %s27, 0
      %p229 = por %p227, %p228
      %s231 = sadd.s32 %s230, 1
      %p234 = scmp.eq.s32.totalorder %s21, 7
      %p235 = scmp.ne.s32.totalorder %s230, %s232
      %p236 = scmp.eq.s32.totalorder %s21, 0
      %p237 = por %p235, %p236
      %p238 = scmp.ne.s32.totalorder %s230, %s232
      %p239 = scmp.eq.s32.totalorder %s26, 7
      %p240 = por %p238, %p239
      %p241 = scmp.ne.s32.totalorder %s232, %s233
      %p242 = scmp.eq.s32.totalorder %s26, 0
      %p243 = por %p241, %p242
      %p244 = scmp.ne.s32.totalorder %s232, %s233
      %p245 = scmp.eq.s32.totalorder %s27, 7
      %p246 = por %p244, %p245
      %p248 = scmp.ne.s32.totalorder %s233, %s247
      %p249 = scmp.eq.s32.totalorder %s27, 0
      %p250 = por %p248, %p249
      %s252 = sadd.s32 %s251, 1
      %p255 = scmp.eq.s32.totalorder %s21, 7
      %p256 = scmp.ne.s32.totalorder %s251, %s253
      %p257 = scmp.eq.s32.totalorder %s21, 0
      %p258 = por %p256, %p257
      %p259 = scmp.ne.s32.totalorder %s251, %s253
      %p260 = scmp.eq.s32.totalorder %s26, 7
      %p261 = por %p259, %p260
      %p262 = scmp.ne.s32.totalorder %s253, %s254
      %p263 = scmp.eq.s32.totalorder %s26, 0
      %p264 = por %p262, %p263
      %p265 = scmp.ne.s32.totalorder %s253, %s254
      %p266 = scmp.eq.s32.totalorder %s27, 7
      %p267 = por %p265, %p266
      %p269 = scmp.ne.s32.totalorder %s254, %s268
      %p270 = scmp.eq.s32.totalorder %s27, 0
      %p271 = por %p269, %p270
      %s272 = ssub.s32 %s21, %s28
      %p273 = scmp.eq.s32.totalorder %s272, 0
      %s275 = sadd.s32 %s274, 1
      %s276 = scalar_select %p273, %s274, %s275
      %p279 = pneg %p273
      %p280 = scmp.eq.s32.totalorder %s21, 7
      %p281 = por %p279, %p280
      %p282 = scmp.ne.s32.totalorder %s274, %s277
      %p283 = scmp.eq.s32.totalorder %s21, 0
      %p284 = por %p282, %p283
      %p285 = scmp.ne.s32.totalorder %s274, %s277
      %p286 = scmp.eq.s32.totalorder %s26, 7
      %p287 = por %p285, %p286
      %p288 = scmp.ne.s32.totalorder %s277, %s278
      %p289 = scmp.eq.s32.totalorder %s26, 0
      %p290 = por %p288, %p289
      %p291 = scmp.ne.s32.totalorder %s277, %s278
      %p292 = scmp.eq.s32.totalorder %s27, 7
      %p293 = por %p291, %p292
      %p295 = scmp.ne.s32.totalorder %s278, %s294
      %p296 = scmp.eq.s32.totalorder %s27, 0
      %p297 = por %p295, %p296
      %s298 = ssub.s32 7, %s21
      %s299 = ssub.s32 7, %s28
      %s300 = ssub.s32 %s298, %s299
      %p301 = scmp.eq.s32.totalorder %s300, 0
      %s303 = sadd.s32 %s302, 1
      %s304 = scalar_select %p301, %s302, %s303
      %p307 = pneg %p301
      %p308 = scmp.eq.s32.totalorder %s21, 7
      %p309 = por %p307, %p308
      %p310 = scmp.ne.s32.totalorder %s302, %s305
      %p311 = scmp.eq.s32.totalorder %s21, 0
      %p312 = por %p310, %p311
      %p313 = scmp.ne.s32.totalorder %s302, %s305
      %p314 = scmp.eq.s32.totalorder %s26, 7
      %p315 = por %p313, %p314
      %p316 = scmp.ne.s32.totalorder %s305, %s306
      %p317 = scmp.eq.s32.totalorder %s26, 0
      %p318 = por %p316, %p317
      %p319 = scmp.ne.s32.totalorder %s305, %s306
      %p320 = scmp.eq.s32.totalorder %s27, 7
      %p321 = por %p319, %p320
      %p323 = scmp.ne.s32.totalorder %s306, %s322
      %p324 = scmp.eq.s32.totalorder %s27, 0
      %p325 = por %p323, %p324
      %s327 = sadd.s32 %s326, 1
      %p330 = scmp.eq.s32.totalorder %s21, 7
      %p331 = scmp.ne.s32.totalorder %s326, %s328
      %p332 = scmp.eq.s32.totalorder %s21, 0
      %p333 = por %p331, %p332
      %p334 = scmp.ne.s32.totalorder %s326, %s328
      %p335 = scmp.eq.s32.totalorder %s26, 7
      %p336 = por %p334, %p335
      %p337 = scmp.ne.s32.totalorder %s328, %s329
      %p338 = scmp.eq.s32.totalorder %s26, 0
      %p339 = por %p337, %p338
      %p340 = scmp.ne.s32.totalorder %s328, %s329
      %p341 = scmp.eq.s32.totalorder %s27, 7
      %p342 = por %p340, %p341
      %p344 = scmp.ne.s32.totalorder %s329, %s343
      %p345 = scmp.eq.s32.totalorder %s27, 0
      %p346 = por %p344, %p345
      %p347 = scmp.le.s32.totalorder 1, %s21
      %p348 = scmp.lt.s32.totalorder %s21, 9
      %p349 = pnand %p347, %p348
      %p350 = pneg %p349
      // Predicated region
      $region9: #{encoder_forward.1} parent=5 // pred_check
        _
      $region10: #{encoder_forward.1} parent=5 // pred_check_branch
        %352 = sbr.rel (%p349) target = $region12
      $region11: #{encoder_forward.1} parent=5 // pred_region
        %s353 = ssub.s32 %s21, 1
        // Predicated region
        $region13: #{encoder_forward.1} parent=11 // pred_check
          %p354 = pneg %p96
        $region14: #{encoder_forward.1} parent=11 // pred_check_branch
          %356 = sbr.rel (%p354) target = $region16
        $region15: #{encoder_forward.1} parent=11 // pred_region
          _
        $region16: #{encoder_forward.1} parent=11 // pred_fallthru
          _
        // Predicated region
        $region17: #{encoder_forward.1} parent=11 // pred_check
          %p357 = pneg %p117
        $region18: #{encoder_forward.1} parent=11 // pred_check_branch
          %359 = sbr.rel (%p357) target = $region20
        $region19: #{encoder_forward.1} parent=11 // pred_region
          _
        $region20: #{encoder_forward.1} parent=11 // pred_fallthru
          _
        // Predicated region
        $region21: #{encoder_forward.1} parent=11 // pred_check
          %p360 = pneg %p138
        $region22: #{encoder_forward.1} parent=11 // pred_check_branch
          %362 = sbr.rel (%p360) target = $region24
        $region23: #{encoder_forward.1} parent=11 // pred_region
          _
        $region24: #{encoder_forward.1} parent=11 // pred_fallthru
          _
        // Predicated region
        $region25: #{encoder_forward.1} parent=11 // pred_check
          %p363 = pneg %p159
        $region26: #{encoder_forward.1} parent=11 // pred_check_branch
          %365 = sbr.rel (%p363) target = $region28
        $region27: #{encoder_forward.1} parent=11 // pred_region
          _
        $region28: #{encoder_forward.1} parent=11 // pred_fallthru
          _
        // Predicated region
        $region29: #{encoder_forward.1} parent=11 // pred_check
          %p366 = pneg %p180
        $region30: #{encoder_forward.1} parent=11 // pred_check_branch
          %368 = sbr.rel (%p366) target = $region32
        $region31: #{encoder_forward.1} parent=11 // pred_region
          _
        $region32: #{encoder_forward.1} parent=11 // pred_fallthru
          _
        // Predicated region
        $region33: #{encoder_forward.1} parent=11 // pred_check
          %p369 = pneg %p201
        $region34: #{encoder_forward.1} parent=11 // pred_check_branch
          %371 = sbr.rel (%p369) target = $region36
        $region35: #{encoder_forward.1} parent=11 // pred_region
          _
        $region36: #{encoder_forward.1} parent=11 // pred_fallthru
          _
        // Predicated region
        $region37: #{encoder_forward.1} parent=11 // pred_check
          %p372 = pneg %p222
        $region38: #{encoder_forward.1} parent=11 // pred_check_branch
          %374 = sbr.rel (%p372) target = $region40
        $region39: #{encoder_forward.1} parent=11 // pred_region
          _
        $region40: #{encoder_forward.1} parent=11 // pred_fallthru
          _
        // Predicated region
        $region41: #{encoder_forward.1} parent=11 // pred_check
          %p375 = pneg %p243
        $region42: #{encoder_forward.1} parent=11 // pred_check_branch
          %377 = sbr.rel (%p375) target = $region44
        $region43: #{encoder_forward.1} parent=11 // pred_region
          _
        $region44: #{encoder_forward.1} parent=11 // pred_fallthru
          _
        // Predicated region
        $region45: #{encoder_forward.1} parent=11 // pred_check
          %p378 = pneg %p264
        $region46: #{encoder_forward.1} parent=11 // pred_check_branch
          %380 = sbr.rel (%p378) target = $region48
        $region47: #{encoder_forward.1} parent=11 // pred_region
          _
        $region48: #{encoder_forward.1} parent=11 // pred_fallthru
          _
      $region12: #{encoder_forward.1} parent=5 // pred_fallthru
        _
      %p381 = scmp.lt.s32.totalorder %s21, 8
      // Predicated region
      $region49: #{encoder_forward.1} parent=5 // pred_check
        %p382 = pneg %p381
      $region50: #{encoder_forward.1} parent=5 // pred_check_branch
        %384 = sbr.rel (%p382) target = $region52
      $region51: #{encoder_forward.1} parent=5 // pred_region
        // Predicated region
        $region53: #{encoder_forward.1} parent=51 // pred_check
          %p385 = pneg %p41
        $region54: #{encoder_forward.1} parent=51 // pred_check_branch
          %387 = sbr.rel (%p385) target = $region56
        $region55: #{encoder_forward.1} parent=51 // pred_region
          %p388 = scmp.lt.s32.totalorder %s21, 7
          %s389 = scalar_select %p388, %s21, 7
          %s390 = smul.addr %s389, 2
          %s391 = scalar_lea.vmem %s0, %s390
        $region56: #{encoder_forward.1} parent=51 // pred_fallthru
          _
        // Predicated region
        $region57: #{encoder_forward.1} parent=51 // pred_check
          %p392 = pneg %p69
        $region58: #{encoder_forward.1} parent=51 // pred_check_branch
          %394 = sbr.rel (%p392) target = $region60
        $region59: #{encoder_forward.1} parent=51 // pred_region
          %s395 = ssub.s32 7, %s21
          %p396 = scmp.lt.s32.totalorder %s395, 7
          %s397 = scalar_select %p396, %s395, 7
          %s398 = smul.addr %s397, 2
          %s399 = scalar_lea.vmem %s1, %s398
          %s400 = ssub.s32 7, %s21
        $region60: #{encoder_forward.1} parent=51 // pred_fallthru
          _
      $region52: #{encoder_forward.1} parent=5 // pred_fallthru
        _
      %p401 = scmp.le.s32.totalorder 1, %s21
      %p402 = scmp.lt.s32.totalorder %s21, 9
      %p403 = pnand %p401, %p402
      %p404 = pneg %p403
      // Predicated region
      $region61: #{encoder_forward.1} parent=5 // pred_check
        _
      $region62: #{encoder_forward.1} parent=5 // pred_check_branch
        %406 = sbr.rel (%p403) target = $region64
      $region63: #{encoder_forward.1} parent=5 // pred_region
        %s407 = ssub.s32 %s21, 1
        %p408 = scmp.lt.s32.totalorder %s26, 7
        %s409 = scalar_select %p408, %s26, 7
        %s410 = smul.addr %s409, 2
        %s411 = scalar_lea.vmem %s0, %s410
        %p412 = pneg %p47
        %p413 = pneg %p44
        %s414 = ssub.s32 7, %s26
        %p415 = scmp.lt.s32.totalorder %s414, 7
        %s416 = scalar_select %p415, %s414, 7
        %s417 = smul.addr %s416, 2
        %s418 = scalar_lea.vmem %s1, %s417
        %p419 = pneg %p75
        %p420 = pneg %p72
        %p421 = pneg %p96
        %p422 = pneg %p93
        %p423 = pneg %p117
        %p424 = pneg %p114
        %p425 = pneg %p138
        %p426 = pneg %p135
        %p427 = pneg %p159
        %p428 = pneg %p156
        %p429 = pneg %p180
        %p430 = pneg %p177
        %p431 = pneg %p201
        %p432 = pneg %p198
        %p433 = pneg %p222
        %p434 = pneg %p219
        %p435 = pneg %p243
        %p436 = pneg %p240
        %p437 = pneg %p264
        %p438 = pneg %p261
        %p439 = pneg %p290
        %p440 = pneg %p287
        %p441 = scmp.lt.s32.totalorder %s26, 7
        %s442 = scalar_select %p441, %s26, 7
        %s443 = smul.addr %s442, 2
        %s444 = scalar_lea.vmem %s11, %s443
        %p445 = pneg %p318
        %p446 = pneg %p315
        %s447 = ssub.s32 7, %s26
        %p448 = scmp.lt.s32.totalorder %s447, 7
        %s449 = scalar_select %p448, %s447, 7
        %s450 = smul.addr %s449, 2
        %s451 = scalar_lea.vmem %s12, %s450
        %p452 = pneg %p339
        %p453 = pneg %p336
        %p454 = scmp.lt.s32.totalorder %s26, 7
        %s455 = scalar_select %p454, %s26, 7
        %s456 = smul.addr %s455, 2
        %s457 = scalar_lea.vmem %s0, %s456
        %s458 = ssub.s32 7, %s26
        %p459 = scmp.lt.s32.totalorder %s458, 7
        %s460 = scalar_select %p459, %s458, 7
        %s461 = smul.addr %s460, 2
        %s462 = scalar_lea.vmem %s1, %s461
        %s463 = ssub.s32 7, %s26
        %p464 = scmp.lt.s32.totalorder %s26, 7
        %s465 = scalar_select %p464, %s26, 7
        %s466 = smul.addr %s465, 2
        %s467 = scalar_lea.vmem %s11, %s466
        %s468 = ssub.s32 7, %s26
        %p469 = scmp.lt.s32.totalorder %s468, 7
        %s470 = scalar_select %p469, %s468, 7
        %s471 = smul.addr %s470, 2
        %s472 = scalar_lea.vmem %s12, %s471
        %s473 = ssub.s32 7, %s26
        %p474 = scmp.eq.s32.totalorder %s26, 0
        // Predicated region
        $region65: #{encoder_forward.1} parent=63 // pred_check
          %p475 = pneg %p474
        $region66: #{encoder_forward.1} parent=63 // pred_check_branch
          %477 = sbr.rel (%p475) target = $region68
        $region67: #{encoder_forward.1} parent=63 // pred_region
          %v478 = vld [vmem:[%s2] sm:$0x3]
          %vm479 = vcmask 254976
          %480 = vst.msk [vmem:[#allocation2] sm:$0x3] %vm479, %v478
          %s481 = scalar_lea.vmem %s2, 2
          %v482 = vld [vmem:[%s481] sm:$0x3]
          %483 = vst.msk [vmem:[#allocation3] sm:$0x3] %vm479, %v482
        $region68: #{encoder_forward.1} parent=63 // pred_fallthru
          _
        %v484 = vld [vmem:[%s457] sm:$0x3]
        %v485 = vld [vmem:[#allocation2] sm:$0x3]
        %v486 = vld [vmem:[%s3] sm:$0xff]
        %v487 = vld [vmem:[%s3 + $0x8] sm:$0xff]
        %v488 = vld [vmem:[%s3 + $0x10] sm:$0xff]
        %v489 = vld [vmem:[%s3 + $0x18] sm:$0xff]
        %v490 = vld [vmem:[%s5] sm:$0x1]
        %v492 = vlaneseq
        %v493 = vshrl.u32 %v492, 7
        %v494 = vsub.s32 0, %v493
        %v495 = vrot.slane %v490, %v494
        %vm497 = vcmask 261120
        %v499 = vsel %vm497, %v484, 0
        %501 = vmatprep.subr.mxu0 0.0
        %502 = vmatpush1.msra.mxu0 0.0
        %503 = vmatprep.subr.mxu0 0.0
        %504 = vmatpush1.msra.mxu0 0.0
        %505 = vmatprep.subr.mxu0 0.0
        %506 = vmatpush1.msra.mxu0 0.0
        %507 = vmatprep.subr.mxu0 0.0
        %508 = vmatpush1.msra.mxu0 0.0
        %509 = vmatprep.subr.mxu0 0.0
        %510 = vmatpush1.msra.mxu0 0.0
        %511 = vmatprep.subr.mxu0 0.0
        %512 = vmatpush1.msra.mxu0 0.0
        %513 = vmatprep.subr.mxu0 0.0
        %514 = vmatpush1.msra.mxu0 0.0
        %515 = vmatprep.subr.mxu0 0.0
        %516 = vmatpush1.msra.mxu0 0.0
        %517 = vmatprep.subr.mxu0 0.0
        %518 = vmatpush1.msra.mxu0 0.0
        %519 = vmatprep.subr.mxu0 0.0
        %520 = vmatpush1.msra.mxu0 0.0
        %521 = vmatprep.subr.mxu0 0.0
        %522 = vmatpush1.msra.mxu0 0.0
        %523 = vmatprep.subr.mxu0 0.0
        %524 = vmatpush1.msra.mxu0 0.0
        %525 = vmatprep.subr.mxu0 0.0
        %526 = vmatpush1.msra.mxu0 %v489
        %527 = vmatprep.subr.mxu0 0.0
        %528 = vmatpush1.msra.mxu0 %v488
        %529 = vmatprep.subr.mxu0 0.0
        %530 = vmatpush1.msra.mxu0 %v487
        %531 = vmatprep.subr.mxu0 0.0
        %532 = vmatpush1.msra.mxu0 %v486
        %533 = vmatprep.subr.mxu0 0.0
        %534 = vmatpush2.msra.mxu0 0.0
        %535 = vmatprep.subr.mxu0 0.0
        %536 = vmatpush2.msra.mxu0 0.0
        %537 = vmatprep.subr.mxu0 0.0
        %538 = vmatpush2.msra.mxu0 0.0
        %539 = vmatprep.subr.mxu0 0.0
        %540 = vmatpush2.msra.mxu0 0.0
        %541 = vmatprep.subr.mxu0 0.0
        %542 = vmatpush2.msra.mxu0 0.0
        %543 = vmatprep.subr.mxu0 0.0
        %544 = vmatpush2.msra.mxu0 0.0
        %545 = vmatprep.subr.mxu0 0.0
        %546 = vmatpush2.msra.mxu0 0.0
        %547 = vmatprep.subr.mxu0 0.0
        %548 = vmatpush2.msra.mxu0 0.0
        %549 = vmatprep.subr.mxu0 0.0
        %550 = vmatpush2.msra.mxu0 0.0
        %551 = vmatprep.subr.mxu0 0.0
        %552 = vmatpush2.msra.mxu0 0.0
        %553 = vmatprep.subr.mxu0 0.0
        %554 = vmatpush2.msra.mxu0 0.0
        %555 = vmatprep.subr.mxu0 0.0
        %556 = vmatpush2.msra.mxu0 0.0
        %557 = vmatprep.subr.mxu0 0.0
        %558 = vmatpush2.msra.mxu0 0.0
        %559 = vmatprep.subr.mxu0 0.0
        %560 = vmatpush2.msra.mxu0 0.0
        %561 = vmatprep.subr.mxu0 0.0
        %562 = vmatpush2.msra.mxu0 0.0
        %563 = vmatprep.subr.mxu0 0.0
        %564 = vmatpush2.msra.mxu0 0.0
        %565 = vmatprep.mubr.f32.mxu0 0.0
        %566 = vmatmul.mubr.f32.gmra.mxu0 %v499
        %v567 = vpop.f32.mrf.mxu0
        %v568 = vadd.f32 %v495, %v567
        %v569 = vpop.f32.mrf.mxu0
        %570 = vdwg.mxu0
        %v571 = vld [vmem:[%s4] sm:$0xff]
        %v572 = vld [vmem:[%s4 + $0x8] sm:$0xff]
        %v573 = vld [vmem:[%s4 + $0x10] sm:$0xff]
        %v574 = vld [vmem:[%s4 + $0x18] sm:$0xff]
        %v575 = vld [vmem:[%s6] sm:$0x1]
        %v577 = vlaneseq
        %v578 = vshrl.u32 %v577, 7
        %v579 = vsub.s32 0, %v578
        %v580 = vrot.slane %v575, %v579
        %v583 = vsel %vm497, %v485, 0
        %585 = vmatprep.subr.mxu0 0.0
        %586 = vmatpush1.msra.mxu0 0.0
        %587 = vmatprep.subr.mxu0 0.0
        %588 = vmatpush1.msra.mxu0 0.0
        %589 = vmatprep.subr.mxu0 0.0
        %590 = vmatpush1.msra.mxu0 0.0
        %591 = vmatprep.subr.mxu0 0.0
        %592 = vmatpush1.msra.mxu0 0.0
        %593 = vmatprep.subr.mxu0 0.0
        %594 = vmatpush1.msra.mxu0 0.0
        %595 = vmatprep.subr.mxu0 0.0
        %596 = vmatpush1.msra.mxu0 0.0
        %597 = vmatprep.subr.mxu0 0.0
        %598 = vmatpush1.msra.mxu0 0.0
        %599 = vmatprep.subr.mxu0 0.0
        %600 = vmatpush1.msra.mxu0 0.0
        %601 = vmatprep.subr.mxu0 0.0
        %602 = vmatpush1.msra.mxu0 0.0
        %603 = vmatprep.subr.mxu0 0.0
        %604 = vmatpush1.msra.mxu0 0.0
        %605 = vmatprep.subr.mxu0 0.0
        %606 = vmatpush1.msra.mxu0 0.0
        %607 = vmatprep.subr.mxu0 0.0
        %608 = vmatpush1.msra.mxu0 0.0
        %609 = vmatprep.subr.mxu0 0.0
        %610 = vmatpush1.msra.mxu0 %v574
        %611 = vmatprep.subr.mxu0 0.0
        %612 = vmatpush1.msra.mxu0 %v573
        %613 = vmatprep.subr.mxu0 0.0
        %614 = vmatpush1.msra.mxu0 %v572
        %615 = vmatprep.subr.mxu0 0.0
        %616 = vmatpush1.msra.mxu0 %v571
        %617 = vmatprep.subr.mxu0 0.0
        %618 = vmatpush2.msra.mxu0 0.0
        %619 = vmatprep.subr.mxu0 0.0
        %620 = vmatpush2.msra.mxu0 0.0
        %621 = vmatprep.subr.mxu0 0.0
        %622 = vmatpush2.msra.mxu0 0.0
        %623 = vmatprep.subr.mxu0 0.0
        %624 = vmatpush2.msra.mxu0 0.0
        %625 = vmatprep.subr.mxu0 0.0
        %626 = vmatpush2.msra.mxu0 0.0
        %627 = vmatprep.subr.mxu0 0.0
        %628 = vmatpush2.msra.mxu0 0.0
        %629 = vmatprep.subr.mxu0 0.0
        %630 = vmatpush2.msra.mxu0 0.0
        %631 = vmatprep.subr.mxu0 0.0
        %632 = vmatpush2.msra.mxu0 0.0
        %633 = vmatprep.subr.mxu0 0.0
        %634 = vmatpush2.msra.mxu0 0.0
        %635 = vmatprep.subr.mxu0 0.0
        %636 = vmatpush2.msra.mxu0 0.0
        %637 = vmatprep.subr.mxu0 0.0
        %638 = vmatpush2.msra.mxu0 0.0
        %639 = vmatprep.subr.mxu0 0.0
        %640 = vmatpush2.msra.mxu0 0.0
        %641 = vmatprep.subr.mxu0 0.0
        %642 = vmatpush2.msra.mxu0 0.0
        %643 = vmatprep.subr.mxu0 0.0
        %644 = vmatpush2.msra.mxu0 0.0
        %645 = vmatprep.subr.mxu0 0.0
        %646 = vmatpush2.msra.mxu0 0.0
        %647 = vmatprep.subr.mxu0 0.0
        %648 = vmatpush2.msra.mxu0 0.0
        %649 = vmatprep.mubr.f32.mxu0 0.0
        %650 = vmatmul.mubr.f32.gmra.mxu0 %v583
        %v651 = vpop.f32.mrf.mxu0
        %v652 = vadd.f32 %v580, %v651
        %v653 = vpop.f32.mrf.mxu0
        %654 = vdwg.mxu0
        %v655 = vadd.f32 %v568, %v652
        %v656 = vxor.u32 %v655, 2147483648
        %v657 = vmul.f32 %v656, 1.442695
        %v658 = vpow.pop %v657
        %v659 = vadd.f32 %v658, 1.0
        %v660 = vrcp.pop %v659
        %v661 = vmul.f32 1.0, %v660
        %663 = vrot.lane.b32.xlu0 %v652, 64
        %v664 = vpop.permute.xlu0 %663
        %v666 = vmul.f32 %v661, %v664
        %668 = vrot.lane.b32.xlu0 %v666, 64
        %v669 = vpop.permute.xlu0 %668
        %v671 = vadd.f32 %v568, %v669
        %v672 = vtanh.pop %v671
        %v673 = vsub.f32 1.0, %v661
        %675 = vrot.lane.b32.xlu0 %v672, 96
        %v676 = vpop.permute.xlu0 %675
        %v678 = vmul.f32 %v673, %v676
        %679 = vrot.lane.b32.xlu0 %v485, 32
        %v680 = vpop.permute.xlu0 %679
        %v682 = vmul.f32 %v661, %v680
        %v683 = vadd.f32 %v678, %v682
        %v684 = vld [vmem:[%s462] sm:$0x3]
        %v685 = vld [vmem:[#allocation3] sm:$0x3]
        %v686 = vld [vmem:[%s7] sm:$0xff]
        %v687 = vld [vmem:[%s7 + $0x8] sm:$0xff]
        %v688 = vld [vmem:[%s7 + $0x10] sm:$0xff]
        %v689 = vld [vmem:[%s7 + $0x18] sm:$0xff]
        %v690 = vld [vmem:[%s9] sm:$0x1]
        %v692 = vlaneseq
        %v693 = vshrl.u32 %v692, 7
        %v694 = vsub.s32 0, %v693
        %v695 = vrot.slane %v690, %v694
        %v698 = vsel %vm497, %v684, 0
        %700 = vmatprep.subr.mxu0 0.0
        %701 = vmatpush1.msra.mxu0 0.0
        %702 = vmatprep.subr.mxu0 0.0
        %703 = vmatpush1.msra.mxu0 0.0
        %704 = vmatprep.subr.mxu0 0.0
        %705 = vmatpush1.msra.mxu0 0.0
        %706 = vmatprep.subr.mxu0 0.0
        %707 = vmatpush1.msra.mxu0 0.0
        %708 = vmatprep.subr.mxu0 0.0
        %709 = vmatpush1.msra.mxu0 0.0
        %710 = vmatprep.subr.mxu0 0.0
        %711 = vmatpush1.msra.mxu0 0.0
        %712 = vmatprep.subr.mxu0 0.0
        %713 = vmatpush1.msra.mxu0 0.0
        %714 = vmatprep.subr.mxu0 0.0
        %715 = vmatpush1.msra.mxu0 0.0
        %716 = vmatprep.subr.mxu0 0.0
        %717 = vmatpush1.msra.mxu0 0.0
        %718 = vmatprep.subr.mxu0 0.0
        %719 = vmatpush1.msra.mxu0 0.0
        %720 = vmatprep.subr.mxu0 0.0
        %721 = vmatpush1.msra.mxu0 0.0
        %722 = vmatprep.subr.mxu0 0.0
        %723 = vmatpush1.msra.mxu0 0.0
        %724 = vmatprep.subr.mxu0 0.0
        %725 = vmatpush1.msra.mxu0 %v689
        %726 = vmatprep.subr.mxu0 0.0
        %727 = vmatpush1.msra.mxu0 %v688
        %728 = vmatprep.subr.mxu0 0.0
        %729 = vmatpush1.msra.mxu0 %v687
        %730 = vmatprep.subr.mxu0 0.0
        %731 = vmatpush1.msra.mxu0 %v686
        %732 = vmatprep.subr.mxu0 0.0
        %733 = vmatpush2.msra.mxu0 0.0
        %734 = vmatprep.subr.mxu0 0.0
        %735 = vmatpush2.msra.mxu0 0.0
        %736 = vmatprep.subr.mxu0 0.0
        %737 = vmatpush2.msra.mxu0 0.0
        %738 = vmatprep.subr.mxu0 0.0
        %739 = vmatpush2.msra.mxu0 0.0
        %740 = vmatprep.subr.mxu0 0.0
        %741 = vmatpush2.msra.mxu0 0.0
        %742 = vmatprep.subr.mxu0 0.0
        %743 = vmatpush2.msra.mxu0 0.0
        %744 = vmatprep.subr.mxu0 0.0
        %745 = vmatpush2.msra.mxu0 0.0
        %746 = vmatprep.subr.mxu0 0.0
        %747 = vmatpush2.msra.mxu0 0.0
        %748 = vmatprep.subr.mxu0 0.0
        %749 = vmatpush2.msra.mxu0 0.0
        %750 = vmatprep.subr.mxu0 0.0
        %751 = vmatpush2.msra.mxu0 0.0
        %752 = vmatprep.subr.mxu0 0.0
        %753 = vmatpush2.msra.mxu0 0.0
        %754 = vmatprep.subr.mxu0 0.0
        %755 = vmatpush2.msra.mxu0 0.0
        %756 = vmatprep.subr.mxu0 0.0
        %757 = vmatpush2.msra.mxu0 0.0
        %758 = vmatprep.subr.mxu0 0.0
        %759 = vmatpush2.msra.mxu0 0.0
        %760 = vmatprep.subr.mxu0 0.0
        %761 = vmatpush2.msra.mxu0 0.0
        %762 = vmatprep.subr.mxu0 0.0
        %763 = vmatpush2.msra.mxu0 0.0
        %764 = vmatprep.mubr.f32.mxu0 0.0
        %765 = vmatmul.mubr.f32.gmra.mxu0 %v698
        %v766 = vpop.f32.mrf.mxu0
        %v767 = vadd.f32 %v695, %v766
        %v768 = vpop.f32.mrf.mxu0
        %769 = vdwg.mxu0
        %v770 = vld [vmem:[%s8] sm:$0xff]
        %v771 = vld [vmem:[%s8 + $0x8] sm:$0xff]
        %v772 = vld [vmem:[%s8 + $0x10] sm:$0xff]
        %v773 = vld [vmem:[%s8 + $0x18] sm:$0xff]
        %v774 = vld [vmem:[%s10] sm:$0x1]
        %v776 = vlaneseq
        %v777 = vshrl.u32 %v776, 7
        %v778 = vsub.s32 0, %v777
        %v779 = vrot.slane %v774, %v778
        %v782 = vsel %vm497, %v685, 0
        %784 = vmatprep.subr.mxu0 0.0
        %785 = vmatpush1.msra.mxu0 0.0
        %786 = vmatprep.subr.mxu0 0.0
        %787 = vmatpush1.msra.mxu0 0.0
        %788 = vmatprep.subr.mxu0 0.0
        %789 = vmatpush1.msra.mxu0 0.0
        %790 = vmatprep.subr.mxu0 0.0
        %791 = vmatpush1.msra.mxu0 0.0
        %792 = vmatprep.subr.mxu0 0.0
        %793 = vmatpush1.msra.mxu0 0.0
        %794 = vmatprep.subr.mxu0 0.0
        %795 = vmatpush1.msra.mxu0 0.0
        %796 = vmatprep.subr.mxu0 0.0
        %797 = vmatpush1.msra.mxu0 0.0
        %798 = vmatprep.subr.mxu0 0.0
        %799 = vmatpush1.msra.mxu0 0.0
        %800 = vmatprep.subr.mxu0 0.0
        %801 = vmatpush1.msra.mxu0 0.0
        %802 = vmatprep.subr.mxu0 0.0
        %803 = vmatpush1.msra.mxu0 0.0
        %804 = vmatprep.subr.mxu0 0.0
        %805 = vmatpush1.msra.mxu0 0.0
        %806 = vmatprep.subr.mxu0 0.0
        %807 = vmatpush1.msra.mxu0 0.0
        %808 = vmatprep.subr.mxu0 0.0
        %809 = vmatpush1.msra.mxu0 %v773
        %810 = vmatprep.subr.mxu0 0.0
        %811 = vmatpush1.msra.mxu0 %v772
        %812 = vmatprep.subr.mxu0 0.0
        %813 = vmatpush1.msra.mxu0 %v771
        %814 = vmatprep.subr.mxu0 0.0
        %815 = vmatpush1.msra.mxu0 %v770
        %816 = vmatprep.subr.mxu0 0.0
        %817 = vmatpush2.msra.mxu0 0.0
        %818 = vmatprep.subr.mxu0 0.0
        %819 = vmatpush2.msra.mxu0 0.0
        %820 = vmatprep.subr.mxu0 0.0
        %821 = vmatpush2.msra.mxu0 0.0
        %822 = vmatprep.subr.mxu0 0.0
        %823 = vmatpush2.msra.mxu0 0.0
        %824 = vmatprep.subr.mxu0 0.0
        %825 = vmatpush2.msra.mxu0 0.0
        %826 = vmatprep.subr.mxu0 0.0
        %827 = vmatpush2.msra.mxu0 0.0
        %828 = vmatprep.subr.mxu0 0.0
        %829 = vmatpush2.msra.mxu0 0.0
        %830 = vmatprep.subr.mxu0 0.0
        %831 = vmatpush2.msra.mxu0 0.0
        %832 = vmatprep.subr.mxu0 0.0
        %833 = vmatpush2.msra.mxu0 0.0
        %834 = vmatprep.subr.mxu0 0.0
        %835 = vmatpush2.msra.mxu0 0.0
        %836 = vmatprep.subr.mxu0 0.0
        %837 = vmatpush2.msra.mxu0 0.0
        %838 = vmatprep.subr.mxu0 0.0
        %839 = vmatpush2.msra.mxu0 0.0
        %840 = vmatprep.subr.mxu0 0.0
        %841 = vmatpush2.msra.mxu0 0.0
        %842 = vmatprep.subr.mxu0 0.0
        %843 = vmatpush2.msra.mxu0 0.0
        %844 = vmatprep.subr.mxu0 0.0
        %845 = vmatpush2.msra.mxu0 0.0
        %846 = vmatprep.subr.mxu0 0.0
        %847 = vmatpush2.msra.mxu0 0.0
        %848 = vmatprep.mubr.f32.mxu0 0.0
        %849 = vmatmul.mubr.f32.gmra.mxu0 %v782
        %v850 = vpop.f32.mrf.mxu0
        %v851 = vadd.f32 %v779, %v850
        %v852 = vpop.f32.mrf.mxu0
        %853 = vdwg.mxu0
        %v854 = vadd.f32 %v767, %v851
        %v855 = vxor.u32 %v854, 2147483648
        %v856 = vmul.f32 %v855, 1.442695
        %v857 = vpow.pop %v856
        %v858 = vadd.f32 %v857, 1.0
        %v859 = vrcp.pop %v858
        %v860 = vmul.f32 1.0, %v859
        %862 = vrot.lane.b32.xlu0 %v851, 64
        %v863 = vpop.permute.xlu0 %862
        %v865 = vmul.f32 %v860, %v863
        %867 = vrot.lane.b32.xlu0 %v865, 64
        %v868 = vpop.permute.xlu0 %867
        %v870 = vadd.f32 %v767, %v868
        %v871 = vtanh.pop %v870
        %v872 = vsub.f32 1.0, %v860
        %874 = vrot.lane.b32.xlu0 %v871, 96
        %v875 = vpop.permute.xlu0 %874
        %v877 = vmul.f32 %v872, %v875
        %878 = vrot.lane.b32.xlu0 %v685, 32
        %v879 = vpop.permute.xlu0 %878
        %v881 = vmul.f32 %v860, %v879
        %v882 = vadd.f32 %v877, %v881
        %884 = vrot.lane.b32.xlu0 %v683, 96
        %v885 = vpop.permute.xlu0 %884
        %vm887 = vcmask 254976
        %888 = vst.msk [vmem:[#allocation2] sm:$0x3] %vm887, %v885
        %890 = vrot.lane.b32.xlu0 %v882, 96
        %v891 = vpop.permute.xlu0 %890
        %893 = vst.msk [vmem:[#allocation3] sm:$0x3] %vm887, %v891
        %894 = vst.msk [vmem:[%s467] sm:$0x3] %vm887, %v885
        %895 = vst.msk [vmem:[%s472] sm:$0x3] %vm887, %v891
        %896 = vst.msk [vmem:[#allocation4] sm:$0x3] %vm887, %v885
        %s897 = scalar_lea.vmem [#allocation4], 2
        %898 = vst.msk [vmem:[%s897] sm:$0x3] %vm887, %v891
        %p899 = scmp.lt.s32.totalorder %s26, 7
        %s900 = scalar_select %p899, %s26, 7
        %s901 = smul.addr %s900, 2
        %s902 = scalar_lea.vmem %s11, %s901
        %s903 = ssub.s32 7, %s26
        %p904 = scmp.lt.s32.totalorder %s903, 7
        %s905 = scalar_select %p904, %s903, 7
        %s906 = smul.addr %s905, 2
        %s907 = scalar_lea.vmem %s12, %s906
        // Predicated region
        $region69: #{encoder_forward.1} parent=63 // pred_check
          %p908 = pneg %p287
        $region70: #{encoder_forward.1} parent=63 // pred_check_branch
          %910 = sbr.rel (%p908) target = $region72
        $region71: #{encoder_forward.1} parent=63 // pred_region
          _
        $region72: #{encoder_forward.1} parent=63 // pred_fallthru
          _
        // Predicated region
        $region73: #{encoder_forward.1} parent=63 // pred_check
          %p911 = pneg %p315
        $region74: #{encoder_forward.1} parent=63 // pred_check_branch
          %913 = sbr.rel (%p911) target = $region76
        $region75: #{encoder_forward.1} parent=63 // pred_region
          %s914 = ssub.s32 7, %s26
        $region76: #{encoder_forward.1} parent=63 // pred_fallthru
          _
        // Predicated region
        $region77: #{encoder_forward.1} parent=63 // pred_check
          %p915 = pneg %p336
        $region78: #{encoder_forward.1} parent=63 // pred_check_branch
          %917 = sbr.rel (%p915) target = $region80
        $region79: #{encoder_forward.1} parent=63 // pred_region
          %s919 = ssub.s32 64, 64
          %920 = vsyncadd [#allocation5], %s919
          %s921 = sshll.u32 [#allocation4], 4
          %s922 = int_to_ptr.vmem [resolvable:$true] %s921
          %927 = dma.vmem_to_hbm [thread:$0]  %s922, 64, %s13, [#allocation5], 32, 32, 2
        $region80: #{encoder_forward.1} parent=63 // pred_fallthru
          _
        // Predicated region
        $region81: #{encoder_forward.1} parent=63 // pred_check
          %p928 = pneg %p336
        $region82: #{encoder_forward.1} parent=63 // pred_check_branch
          %930 = sbr.rel (%p928) target = $region84
        $region83: #{encoder_forward.1} parent=63 // pred_region
          %931 = dma.done [#allocation5], 64
        $region84: #{encoder_forward.1} parent=63 // pred_fallthru
          _
      $region64: #{encoder_forward.1} parent=5 // pred_fallthru
        _
      %p932 = scmp.le.s32.totalorder 2, %s21
      // Predicated region
      $region85: #{encoder_forward.1} parent=5 // pred_check
        %p933 = pneg %p932
      $region86: #{encoder_forward.1} parent=5 // pred_check_branch
        %935 = sbr.rel (%p933) target = $region88
      $region87: #{encoder_forward.1} parent=5 // pred_region
        %s936 = ssub.s32 %s21, 2
        // Predicated region
        $region89: #{encoder_forward.1} parent=87 // pred_check
          %p937 = pneg %p293
        $region90: #{encoder_forward.1} parent=87 // pred_check_branch
          %939 = sbr.rel (%p937) target = $region92
        $region91: #{encoder_forward.1} parent=87 // pred_region
          %p940 = scmp.lt.s32.totalorder %s27, 7
          %s941 = scalar_select %p940, %s27, 7
          %s942 = smul.addr %s941, 2
          %s943 = scalar_lea.vmem %s11, %s942
        $region92: #{encoder_forward.1} parent=87 // pred_fallthru
          _
        // Predicated region
        $region93: #{encoder_forward.1} parent=87 // pred_check
          %p944 = pneg %p321
        $region94: #{encoder_forward.1} parent=87 // pred_check_branch
          %946 = sbr.rel (%p944) target = $region96
        $region95: #{encoder_forward.1} parent=87 // pred_region
          %s947 = ssub.s32 7, %s27
          %p948 = scmp.lt.s32.totalorder %s947, 7
          %s949 = scalar_select %p948, %s947, 7
          %s950 = smul.addr %s949, 2
          %s951 = scalar_lea.vmem %s12, %s950
        $region96: #{encoder_forward.1} parent=87 // pred_fallthru
          _
      $region88: #{encoder_forward.1} parent=5 // pred_fallthru
        _
    $region6: #{encoder_forward.1} parent=1 // loop_footer
      %s25 = sadd.s32 1, %s21
    $region7: #{encoder_forward.1} parent=1 // loop_footer_branch
      %20 = sbr.rel target = $region3
    $region8: #{encoder_forward.1} parent=1 // loop_exit
      _
    %952 = vsyncpa [#allocation5], 1
    %s953 = scalar_lea.sflag [#allocation5], 1
    %954 = vsyncpa %s953, 1

</llo_original>
